<compile_context>
chip_gen: v5e
topology: v5e:2x2
jax: 0.10.0
libtpu: 0.0.40
codegen_flags: <defaults>
</compile_context>

<pallas_src>
import functools
import math

import jax
import jax.numpy as jnp
from jax import lax
from jax.experimental import pallas as pl
from jax.experimental.pallas import tpu as pltpu


# Contract dim 1 of x with dim 1 of W (W stored PyTorch-style as [out, in]).
_T_NN = (((1,), (1,)), ((), ()))


def _erf_approx(x):
    # Abramowitz & Stegun 7.1.26, |err| <= 1.5e-7 (float32-exact for gelu),
    # built only from exp/abs/mul/add/where so it lowers cleanly on VPU/EUP.
    p = 0.3275911
    a1, a2, a3, a4, a5 = (0.254829592, -0.284496736, 1.421413741,
                          -1.453152027, 1.061405429)
    z = jnp.abs(x)
    t = 1.0 / (1.0 + p * z)
    poly = ((((a5 * t + a4) * t + a3) * t + a2) * t + a1) * t
    r = 1.0 - poly * jnp.exp(-z * z)
    return jnp.where(x < 0, -r, r)


def _gelu(x):
    # Matches the reference erf-based gelu: x * 0.5 * (1 + erf(x / sqrt(2)))
    return x * 0.5 * (1.0 + _erf_approx(x * 0.7071067811865476))


# ----------------------------- kernels ------------------------------------ #

def _qkv_kernel(x_ref, wq_ref, wk_ref, wv_ref, bq_ref, bk_ref, bv_ref,
                q_ref, k_ref, v_ref):
    x = x_ref[...]

    def proj(w_ref, b_ref):
        return lax.dot_general(x, w_ref[...], _T_NN,
                               preferred_element_type=jnp.float32) + b_ref[...]

    q_ref[...] = proj(wq_ref, bq_ref).astype(q_ref.dtype)
    k_ref[...] = proj(wk_ref, bk_ref).astype(k_ref.dtype)
    v_ref[...] = proj(wv_ref, bv_ref).astype(v_ref.dtype)


def _linear_act_kernel(x_ref, w_ref, b_ref, o_ref, *, activation):
    y = lax.dot_general(x_ref[...], w_ref[...], _T_NN,
                        preferred_element_type=jnp.float32) + b_ref[...]
    if activation == "gelu":
        y = _gelu(y)
    elif activation == "relu":
        y = jnp.maximum(y, 0.0)
    o_ref[...] = y.astype(o_ref.dtype)


def _linear_residual_ln_kernel(x_ref, w_ref, b_ref, r_ref, g_ref, bt_ref, o_ref,
                               *, eps):
    h = lax.dot_general(x_ref[...], w_ref[...], _T_NN,
                        preferred_element_type=jnp.float32) + b_ref[...]
    h = h + r_ref[...].astype(jnp.float32)
    mu = jnp.mean(h, axis=-1, keepdims=True)
    var = jnp.mean(jnp.square(h - mu), axis=-1, keepdims=True)
    y = (h - mu) * lax.rsqrt(var + eps)
    y = y * g_ref[...] + bt_ref[...]
    o_ref[...] = y.astype(o_ref.dtype)


def _biattn_kernel(q_ref, k_ref, v_ref, m_ref, o_ref, *, num_heads, head_dim,
                   scale):
    q = q_ref[0]          # [Sq, H*d]
    k = k_ref[0]          # [Sk, H*d]
    v = v_ref[0]          # [Sk, H*d]
    mask = m_ref[0]       # [1, Sk] additive, broadcast over queries
    ctx = []
    for h in range(num_heads):
        lo = h * head_dim
        hi = lo + head_dim
        qh, kh, vh = q[:, lo:hi], k[:, lo:hi], v[:, lo:hi]
        s = lax.dot_general(qh, kh, _T_NN,
                            preferred_element_type=jnp.float32) * scale + mask
        s = s - jnp.max(s, axis=-1, keepdims=True)
        p = jnp.exp(s)
        p = p / jnp.sum(p, axis=-1, keepdims=True)
        ctx.append(jnp.dot(p, vh, preferred_element_type=jnp.float32))
    o_ref[0] = jnp.concatenate(ctx, axis=-1).astype(o_ref.dtype)


# ----------------------------- wrappers ------------------------------------ #

def _row_tile(m):
    # Largest row tile that evenly divides m (keeps the sublane dim a multiple
    # of 8). At realistic sizes this gives a multi-step "parallel" grid that
    # pipelines the activation DMA and shards across v7x's two TensorCores.
    for t in (512, 256, 128, 64, 32, 16, 8):
        if m > t and m % t == 0:
            return t
    return m


def _fused_qkv(x2d, wq, bq, wk, bk, wv, bv):
    m, kdim = x2d.shape
    n = wq.shape[0]
    tm = _row_tile(m)
    x_spec = pl.BlockSpec((tm, kdim), lambda i: (i, 0))
    w_spec = pl.BlockSpec((n, kdim), lambda i: (0, 0))
    b_spec = pl.BlockSpec((1, n), lambda i: (0, 0))
    o_spec = pl.BlockSpec((tm, n), lambda i: (i, 0))
    o_shape = jax.ShapeDtypeStruct((m, n), x2d.dtype)
    return pl.pallas_call(
        _qkv_kernel,
        out_shape=(o_shape, o_shape, o_shape),
        grid_spec=pltpu.PrefetchScalarGridSpec(
            num_scalar_prefetch=0,
            grid=(m // tm,),
            in_specs=[x_spec, w_spec, w_spec, w_spec, b_spec, b_spec, b_spec],
            out_specs=(o_spec, o_spec, o_spec),
        ),
        compiler_params=pltpu.CompilerParams(
            dimension_semantics=("parallel",)),
    )(x2d, wq, wk, wv, bq.reshape(1, -1), bk.reshape(1, -1), bv.reshape(1, -1))


def _linear(x2d, w, b, activation="none"):
    m, kdim = x2d.shape
    n = w.shape[0]
    tm = _row_tile(m)
    return pl.pallas_call(
        functools.partial(_linear_act_kernel, activation=activation),
        out_shape=jax.ShapeDtypeStruct((m, n), x2d.dtype),
        grid_spec=pltpu.PrefetchScalarGridSpec(
            num_scalar_prefetch=0,
            grid=(m // tm,),
            in_specs=[pl.BlockSpec((tm, kdim), lambda i: (i, 0)),
                      pl.BlockSpec((n, kdim), lambda i: (0, 0)),
                      pl.BlockSpec((1, n), lambda i: (0, 0))],
            out_specs=pl.BlockSpec((tm, n), lambda i: (i, 0)),
        ),
        compiler_params=pltpu.CompilerParams(
            dimension_semantics=("parallel",)),
    )(x2d, w, b.reshape(1, -1))


def _linear_residual_ln(x2d, w, b, residual2d, gamma, beta, eps=1e-12):
    m, kdim = x2d.shape
    n = w.shape[0]
    tm = _row_tile(m)
    return pl.pallas_call(
        functools.partial(_linear_residual_ln_kernel, eps=eps),
        out_shape=jax.ShapeDtypeStruct((m, n), residual2d.dtype),
        grid_spec=pltpu.PrefetchScalarGridSpec(
            num_scalar_prefetch=0,
            grid=(m // tm,),
            in_specs=[pl.BlockSpec((tm, kdim), lambda i: (i, 0)),
                      pl.BlockSpec((n, kdim), lambda i: (0, 0)),
                      pl.BlockSpec((1, n), lambda i: (0, 0)),
                      pl.BlockSpec((tm, n), lambda i: (i, 0)),
                      pl.BlockSpec((1, n), lambda i: (0, 0)),
                      pl.BlockSpec((1, n), lambda i: (0, 0))],
            out_specs=pl.BlockSpec((tm, n), lambda i: (i, 0)),
        ),
        compiler_params=pltpu.CompilerParams(
            dimension_semantics=("parallel",)),
    )(x2d, w, b.reshape(1, -1), residual2d,
      gamma.reshape(1, -1), beta.reshape(1, -1))


def _bi_attention(q, k, v, ext_mask, num_heads):
    # q: [B, Sq, H*d], k/v: [B, Sk, H*d], ext_mask: [B, 1, Sk] additive.
    bsz, sq, hd = q.shape
    sk = k.shape[1]
    d = hd // num_heads
    return pl.pallas_call(
        functools.partial(_biattn_kernel, num_heads=num_heads, head_dim=d,
                          scale=1.0 / math.sqrt(d)),
        out_shape=jax.ShapeDtypeStruct((bsz, sq, hd), q.dtype),
        grid_spec=pltpu.PrefetchScalarGridSpec(
            num_scalar_prefetch=0,
            grid=(bsz,),
            in_specs=[pl.BlockSpec((1, sq, hd), lambda i: (i, 0, 0)),
                      pl.BlockSpec((1, sk, hd), lambda i: (i, 0, 0)),
                      pl.BlockSpec((1, sk, hd), lambda i: (i, 0, 0)),
                      pl.BlockSpec((1, 1, sk), lambda i: (i, 0, 0))],
            out_specs=pl.BlockSpec((1, sq, hd), lambda i: (i, 0, 0)),
        ),
        compiler_params=pltpu.CompilerParams(
            dimension_semantics=("parallel",)),
    )(q, k, v, ext_mask)


# --------------------------- full connection layer ------------------------- #

def bert_connection_layer(params, input_tensor1, attention_mask1,
                          input_tensor2, attention_mask2, num_heads):
    """ViLBERT BertConnectionLayer forward (eval mode).

    input_tensor1: [B, S1, v_hidden]  (visual stream)
    input_tensor2: [B, S2, hidden]    (text stream)
    attention_mask*: additive extended masks [B, 1, 1, S*].
    Returns (layer_output1, layer_output2, co_attention_probs=None).
    """
    p = params
    bsz, s1, dv = input_tensor1.shape
    _, s2, dt = input_tensor2.shape

    x1 = input_tensor1.reshape(bsz * s1, dv)
    x2 = input_tensor2.reshape(bsz * s2, dt)
    hd = p["query1_w"].shape[0]          # bi_hidden_size (= all_head_size)

    # --- BertBiAttention: fused Q/K/V projections per stream ---
    q1, k1, v1 = _fused_qkv(x1, p["query1_w"], p["query1_b"],
                            p["key1_w"], p["key1_b"],
                            p["value1_w"], p["value1_b"])
    q2, k2, v2 = _fused_qkv(x2, p["query2_w"], p["query2_b"],
                            p["key2_w"], p["key2_b"],
                            p["value2_w"], p["value2_b"])
    q1, k1, v1 = (t.reshape(bsz, s1, hd) for t in (q1, k1, v1))
    q2, k2, v2 = (t.reshape(bsz, s2, hd) for t in (q2, k2, v2))

    mask1 = attention_mask1.reshape(bsz, 1, s1)
    mask2 = attention_mask2.reshape(bsz, 1, s2)

    # context_layer1: text queries attend over image keys/values (length S2).
    ctx1 = _bi_attention(q2, k1, v1, mask1, num_heads)   # [B, S2, HD]
    # context_layer2: image queries attend over text keys/values (length S1).
    ctx2 = _bi_attention(q1, k2, v2, mask2, num_heads)   # [B, S1, HD]

    # TODO(synk): dropout layers (attention-prob & hidden dropouts) omitted —
    # eval/inference semantics (p = 0); visualization attn_data returns None.

    # --- BertBiOutput: dense + residual + LayerNorm (fused) ---
    attn_out1 = _linear_residual_ln(ctx2.reshape(bsz * s1, hd),
                                    p["bi_dense1_w"], p["bi_dense1_b"], x1,
                                    p["bi_ln1_g"], p["bi_ln1_b"])
    attn_out2 = _linear_residual_ln(ctx1.reshape(bsz * s2, hd),
                                    p["bi_dense2_w"], p["bi_dense2_b"], x2,
                                    p["bi_ln2_g"], p["bi_ln2_b"])

    # --- visual-stream FFN (BertImageIntermediate + BertImageOutput) ---
    inter1 = _linear(attn_out1, p["v_inter_w"], p["v_inter_b"], activation="gelu")
    layer_out1 = _linear_residual_ln(inter1, p["v_out_w"], p["v_out_b"],
                                     attn_out1, p["v_ln_g"], p["v_ln_b"])

    # --- text-stream FFN (BertIntermediate + BertOutput) ---
    inter2 = _linear(attn_out2, p["t_inter_w"], p["t_inter_b"], activation="gelu")
    layer_out2 = _linear_residual_ln(inter2, p["t_out_w"], p["t_out_b"],
                                     attn_out2, p["t_ln_g"], p["t_ln_b"])

    return (layer_out1.reshape(bsz, s1, dv),
            layer_out2.reshape(bsz, s2, dt),
            None)


# ------------------------------- reference --------------------------------- #

def _reference(params, x1, mask1, x2, mask2, num_heads):
    p = params
    hp = lax.Precision.HIGHEST

    def linear(x, w, b):
        return jnp.einsum("bsk,nk->bsn", x, w, precision=hp) + b

    def heads(x):
        b_, s, hd = x.shape
        return x.reshape(b_, s, num_heads, hd // num_heads).transpose(0, 2, 1, 3)

    def merge(x):
        b_, h, s, d = x.shape
        return x.transpose(0, 2, 1, 3).reshape(b_, s, h * d)

    def attn(q, k, v, mask):
        d = q.shape[-1]
        s = jnp.einsum("bhqd,bhkd->bhqk", q, k, precision=hp) / math.sqrt(d)
        s = s + mask
        pr = jax.nn.softmax(s, axis=-1)
        return merge(jnp.einsum("bhqk,bhkd->bhqd", pr, v, precision=hp))

    def layer_norm(x, g, b, eps=1e-12):
        mu = x.mean(-1, keepdims=True)
        var = ((x - mu) ** 2).mean(-1, keepdims=True)
        return (x - mu) / jnp.sqrt(var + eps) * g + b

    def gelu_exact(x):
        return x * 0.5 * (1.0 + jax.scipy.special.erf(x / jnp.sqrt(2.0)))

    q1 = heads(linear(x1, p["query1_w"], p["query1_b"]))
    k1 = heads(linear(x1, p["key1_w"], p["key1_b"]))
    v1 = heads(linear(x1, p["value1_w"], p["value1_b"]))
    q2 = heads(linear(x2, p["query2_w"], p["query2_b"]))
    k2 = heads(linear(x2, p["key2_w"], p["key2_b"]))
    v2 = heads(linear(x2, p["value2_w"], p["value2_b"]))

    ctx1 = attn(q2, k1, v1, mask1)   # [B, S2, HD]
    ctx2 = attn(q1, k2, v2, mask2)   # [B, S1, HD]

    attn_out1 = layer_norm(linear(ctx2, p["bi_dense1_w"], p["bi_dense1_b"]) + x1,
                           p["bi_ln1_g"], p["bi_ln1_b"])
    attn_out2 = layer_norm(linear(ctx1, p["bi_dense2_w"], p["bi_dense2_b"]) + x2,
                           p["bi_ln2_g"], p["bi_ln2_b"])

    inter1 = gelu_exact(linear(attn_out1, p["v_inter_w"], p["v_inter_b"]))
    lo1 = layer_norm(linear(inter1, p["v_out_w"], p["v_out_b"]) + attn_out1,
                     p["v_ln_g"], p["v_ln_b"])
    inter2 = gelu_exact(linear(attn_out2, p["t_inter_w"], p["t_inter_b"]))
    lo2 = layer_norm(linear(inter2, p["t_out_w"], p["t_out_b"]) + attn_out2,
                     p["t_ln_g"], p["t_ln_b"])
    return lo1, lo2


# --------------------------------- main ------------------------------------ #

if __name__ == "__main__":
    # Small ViLBERT-like config (head_dim kept at 128 so head slicing is
    # lane-aligned, matching the real bi_hidden=1024/8-head layout).
    B, S1, S2 = 2, 8, 16
    V_HIDDEN, HIDDEN = 32, 64
    BI_HIDDEN, BI_HEADS = 256, 2
    V_INTER, T_INTER = 64, 128

    keys = iter(jax.random.split(jax.random.PRNGKey(0), 64))

    def w(shape, scale=0.05):
        return jax.random.normal(next(keys), shape, dtype=jnp.float32) * scale

    params = {
        "query1_w": w((BI_HIDDEN, V_HIDDEN)), "query1_b": w((BI_HIDDEN,)),
        "key1_w":   w((BI_HIDDEN, V_HIDDEN)), "key1_b":   w((BI_HIDDEN,)),
        "value1_w": w((BI_HIDDEN, V_HIDDEN)), "value1_b": w((BI_HIDDEN,)),
        "query2_w": w((BI_HIDDEN, HIDDEN)),   "query2_b": w((BI_HIDDEN,)),
        "key2_w":   w((BI_HIDDEN, HIDDEN)),   "key2_b":   w((BI_HIDDEN,)),
        "value2_w": w((BI_HIDDEN, HIDDEN)),   "value2_b": w((BI_HIDDEN,)),
        "bi_dense1_w": w((V_HIDDEN, BI_HIDDEN)), "bi_dense1_b": w((V_HIDDEN,)),
        "bi_ln1_g": 1.0 + w((V_HIDDEN,)),        "bi_ln1_b": w((V_HIDDEN,)),
        "bi_dense2_w": w((HIDDEN, BI_HIDDEN)),   "bi_dense2_b": w((HIDDEN,)),
        "bi_ln2_g": 1.0 + w((HIDDEN,)),          "bi_ln2_b": w((HIDDEN,)),
        "v_inter_w": w((V_INTER, V_HIDDEN)), "v_inter_b": w((V_INTER,)),
        "v_out_w":   w((V_HIDDEN, V_INTER)), "v_out_b":   w((V_HIDDEN,)),
        "v_ln_g": 1.0 + w((V_HIDDEN,)),      "v_ln_b":    w((V_HIDDEN,)),
        "t_inter_w": w((T_INTER, HIDDEN)),   "t_inter_b": w((T_INTER,)),
        "t_out_w":   w((HIDDEN, T_INTER)),   "t_out_b":   w((HIDDEN,)),
        "t_ln_g": 1.0 + w((HIDDEN,)),        "t_ln_b":    w((HIDDEN,)),
    }

    input_tensor1 = jax.random.normal(next(keys), (B, S1, V_HIDDEN), jnp.float32)
    input_tensor2 = jax.random.normal(next(keys), (B, S2, HIDDEN), jnp.float32)

    # Extended additive attention masks (BERT convention): 0 = keep, -1e4 = drop.
    bin1 = jnp.ones((B, S1), jnp.float32).at[1, S1 - 2:].set(0.0)
    bin2 = jnp.ones((B, S2), jnp.float32).at[0, S2 - 3:].set(0.0)
    attention_mask1 = (1.0 - bin1)[:, None, None, :] * -10000.0
    attention_mask2 = (1.0 - bin2)[:, None, None, :] * -10000.0

    layer_out1, layer_out2, co_probs = bert_connection_layer(
        params, input_tensor1, attention_mask1,
        input_tensor2, attention_mask2, num_heads=BI_HEADS)
    jax.block_until_ready((layer_out1, layer_out2))

    ref1, ref2 = _reference(params, input_tensor1, attention_mask1,
                            input_tensor2, attention_mask2, BI_HEADS)

    assert layer_out1.shape == (B, S1, V_HIDDEN)
    assert layer_out2.shape == (B, S2, HIDDEN)
    assert co_probs is None
    assert jnp.allclose(layer_out1, ref1, atol=1e-3, rtol=1e-3), \
        float(jnp.max(jnp.abs(layer_out1 - ref1)))
    assert jnp.allclose(layer_out2, ref2, atol=1e-3, rtol=1e-3), \
        float(jnp.max(jnp.abs(layer_out2 - ref2)))

    print("KERNEL_OK")
</pallas_src>

<mosaic_0001>
module attributes {stable_mosaic.version = 11 : i64} {
  func.func @_qkv_kernel(%arg0: i32, %arg1: memref<8x32xf32, #tpu.memory_space<vmem>>, %arg2: memref<256x32xf32, #tpu.memory_space<vmem>>, %arg3: memref<256x32xf32, #tpu.memory_space<vmem>>, %arg4: memref<256x32xf32, #tpu.memory_space<vmem>>, %arg5: memref<1x256xf32, #tpu.memory_space<vmem>>, %arg6: memref<1x256xf32, #tpu.memory_space<vmem>>, %arg7: memref<1x256xf32, #tpu.memory_space<vmem>>, %arg8: memref<8x256xf32, #tpu.memory_space<vmem>>, %arg9: memref<8x256xf32, #tpu.memory_space<vmem>>, %arg10: memref<8x256xf32, #tpu.memory_space<vmem>>) attributes {dimension_semantics = [#tpu.dimension_semantics<parallel>], iteration_bounds = array<i64: 2>, scalar_prefetch = 0 : i64, scratch_operands = 0 : i64, tpu.core_type = #tpu.core_type<tc>, window_params = [{transform_indices = @transform_0, window_bounds = array<i64: 8, 32>}, {pipeline_mode = #tpu.pipeline_mode<synchronous>, transform_indices = @transform_1, window_bounds = array<i64: 256, 32>}, {pipeline_mode = #tpu.pipeline_mode<synchronous>, transform_indices = @transform_2, window_bounds = array<i64: 256, 32>}, {pipeline_mode = #tpu.pipeline_mode<synchronous>, transform_indices = @transform_3, window_bounds = array<i64: 256, 32>}, {pipeline_mode = #tpu.pipeline_mode<synchronous>, transform_indices = @transform_4, window_bounds = array<i64: 1, 256>}, {pipeline_mode = #tpu.pipeline_mode<synchronous>, transform_indices = @transform_5, window_bounds = array<i64: 1, 256>}, {pipeline_mode = #tpu.pipeline_mode<synchronous>, transform_indices = @transform_6, window_bounds = array<i64: 1, 256>}, {transform_indices = @transform_7, window_bounds = array<i64: 8, 256>}, {transform_indices = @transform_8, window_bounds = array<i64: 8, 256>}, {transform_indices = @transform_9, window_bounds = array<i64: 8, 256>}]} {
    %c0 = arith.constant 0 : index
    %c0_0 = arith.constant 0 : index
    %0 = vector.load %arg1[%c0, %c0_0] : memref<8x32xf32, #tpu.memory_space<vmem>>, vector<8x32xf32>
    %c0_1 = arith.constant 0 : index
    %c0_2 = arith.constant 0 : index
    %1 = vector.load %arg2[%c0_1, %c0_2] : memref<256x32xf32, #tpu.memory_space<vmem>>, vector<256x32xf32>
    %cst = arith.constant dense<0.000000e+00> : vector<8x256xf32>
    %2 = tpu.matmul %0, %1, %cst {dimension_numbers = #tpu.dot_dimension_numbers<[1], [1], [0], [0], [0, 0, 1, 0], [], []>} : vector<8x32xf32>, vector<256x32xf32>, vector<8x256xf32> -> vector<8x256xf32>
    %c0_3 = arith.constant 0 : index
    %c0_4 = arith.constant 0 : index
    %3 = vector.load %arg5[%c0_3, %c0_4] : memref<1x256xf32, #tpu.memory_space<vmem>>, vector<1x256xf32>
    %4 = vector.broadcast %3 : vector<1x256xf32> to vector<8x256xf32>
    %5 = arith.addf %2, %4 : vector<8x256xf32>
    %c0_5 = arith.constant 0 : index
    %c0_6 = arith.constant 0 : index
    %6 = vector.load %arg8[%c0_5, %c0_6] : memref<8x256xf32, #tpu.memory_space<vmem>>, vector<8x256xf32>
    tpu.vector_store %arg8[%c0_5, %c0_6], %5 {strides = array<i32>} : memref<8x256xf32, #tpu.memory_space<vmem>>, vector<8x256xf32>,
    %c0_7 = arith.constant 0 : index
    %c0_8 = arith.constant 0 : index
    %7 = vector.load %arg3[%c0_7, %c0_8] : memref<256x32xf32, #tpu.memory_space<vmem>>, vector<256x32xf32>
    %cst_9 = arith.constant dense<0.000000e+00> : vector<8x256xf32>
    %8 = tpu.matmul %0, %7, %cst_9 {dimension_numbers = #tpu.dot_dimension_numbers<[1], [1], [0], [0], [0, 0, 1, 0], [], []>} : vector<8x32xf32>, vector<256x32xf32>, vector<8x256xf32> -> vector<8x256xf32>
    %c0_10 = arith.constant 0 : index
    %c0_11 = arith.constant 0 : index
    %9 = vector.load %arg6[%c0_10, %c0_11] : memref<1x256xf32, #tpu.memory_space<vmem>>, vector<1x256xf32>
    %10 = vector.broadcast %9 : vector<1x256xf32> to vector<8x256xf32>
    %11 = arith.addf %8, %10 : vector<8x256xf32>
    %c0_12 = arith.constant 0 : index
    %c0_13 = arith.constant 0 : index
    %12 = vector.load %arg9[%c0_12, %c0_13] : memref<8x256xf32, #tpu.memory_space<vmem>>, vector<8x256xf32>
    tpu.vector_store %arg9[%c0_12, %c0_13], %11 {strides = array<i32>} : memref<8x256xf32, #tpu.memory_space<vmem>>, vector<8x256xf32>,
    %c0_14 = arith.constant 0 : index
    %c0_15 = arith.constant 0 : index
    %13 = vector.load %arg4[%c0_14, %c0_15] : memref<256x32xf32, #tpu.memory_space<vmem>>, vector<256x32xf32>
    %cst_16 = arith.constant dense<0.000000e+00> : vector<8x256xf32>
    %14 = tpu.matmul %0, %13, %cst_16 {dimension_numbers = #tpu.dot_dimension_numbers<[1], [1], [0], [0], [0, 0, 1, 0], [], []>} : vector<8x32xf32>, vector<256x32xf32>, vector<8x256xf32> -> vector<8x256xf32>
    %c0_17 = arith.constant 0 : index
    %c0_18 = arith.constant 0 : index
    %15 = vector.load %arg7[%c0_17, %c0_18] : memref<1x256xf32, #tpu.memory_space<vmem>>, vector<1x256xf32>
    %16 = vector.broadcast %15 : vector<1x256xf32> to vector<8x256xf32>
    %17 = arith.addf %14, %16 : vector<8x256xf32>
    %c0_19 = arith.constant 0 : index
    %c0_20 = arith.constant 0 : index
    %18 = vector.load %arg10[%c0_19, %c0_20] : memref<8x256xf32, #tpu.memory_space<vmem>>, vector<8x256xf32>
    tpu.vector_store %arg10[%c0_19, %c0_20], %17 {strides = array<i32>} : memref<8x256xf32, #tpu.memory_space<vmem>>, vector<8x256xf32>,
    return
  }
  func.func @transform_0(%arg0: i32) -> (i32, i32) {
    %c0_i32 = arith.constant 0 : i32
    %c0_i32_0 = arith.constant 0 : i32
    return %arg0, %c0_i32 : i32, i32
  }
  func.func @transform_1(%arg0: i32) -> (i32, i32) {
    %c0_i32 = arith.constant 0 : i32
    %c0_i32_0 = arith.constant 0 : i32
    %c0_i32_1 = arith.constant 0 : i32
    return %c0_i32, %c0_i32_0 : i32, i32
  }
  func.func @transform_2(%arg0: i32) -> (i32, i32) {
    %c0_i32 = arith.constant 0 : i32
    %c0_i32_0 = arith.constant 0 : i32
    %c0_i32_1 = arith.constant 0 : i32
    return %c0_i32, %c0_i32_0 : i32, i32
  }
  func.func @transform_3(%arg0: i32) -> (i32, i32) {
    %c0_i32 = arith.constant 0 : i32
    %c0_i32_0 = arith.constant 0 : i32
    %c0_i32_1 = arith.constant 0 : i32
    return %c0_i32, %c0_i32_0 : i32, i32
  }
  func.func @transform_4(%arg0: i32) -> (i32, i32) {
    %c0_i32 = arith.constant 0 : i32
    %c0_i32_0 = arith.constant 0 : i32
    %c0_i32_1 = arith.constant 0 : i32
    return %c0_i32, %c0_i32_0 : i32, i32
  }
  func.func @transform_5(%arg0: i32) -> (i32, i32) {
    %c0_i32 = arith.constant 0 : i32
    %c0_i32_0 = arith.constant 0 : i32
    %c0_i32_1 = arith.constant 0 : i32
    return %c0_i32, %c0_i32_0 : i32, i32
  }
  func.func @transform_6(%arg0: i32) -> (i32, i32) {
    %c0_i32 = arith.constant 0 : i32
    %c0_i32_0 = arith.constant 0 : i32
    %c0_i32_1 = arith.constant 0 : i32
    return %c0_i32, %c0_i32_0 : i32, i32
  }
  func.func @transform_7(%arg0: i32) -> (i32, i32) {
    %c0_i32 = arith.constant 0 : i32
    %c0_i32_0 = arith.constant 0 : i32
    return %arg0, %c0_i32 : i32, i32
  }
  func.func @transform_8(%arg0: i32) -> (i32, i32) {
    %c0_i32 = arith.constant 0 : i32
    %c0_i32_0 = arith.constant 0 : i32
    return %arg0, %c0_i32 : i32, i32
  }
  func.func @transform_9(%arg0: i32) -> (i32, i32) {
    %c0_i32 = arith.constant 0 : i32
    %c0_i32_0 = arith.constant 0 : i32
    return %arg0, %c0_i32 : i32, i32
  }
}

</mosaic_0001>

<llo_original>
// kernel: tpu_custom_call.1
$region0: #{tpu_custom_call.1}
  #allocation0 [shape = 'u32[]', space=smem, size = 0x4, offset = 0x4, fixed_abs, tag = 'smem constant byte address 0x4 - core index']
  #allocation1 [shape = 'u32[72,128]{1,0:T(1,128)}', space=vmem, size = 0x9000, scoped, tag = 'internal scratch']
  %s0 = inlined_call_operand.vmem [shape: f32[16,32], index: 0, kind: input, shape index: {}]
  %s1 = inlined_call_operand.vmem [shape: f32[256,32], index: 1, kind: input, shape index: {}]
  %s2 = inlined_call_operand.vmem [shape: f32[256,32], index: 2, kind: input, shape index: {}]
  %s3 = inlined_call_operand.vmem [shape: f32[256,32], index: 3, kind: input, shape index: {}]
  %s4 = inlined_call_operand.vmem [shape: f32[1,256], index: 4, kind: input, shape index: {}]
  %s5 = inlined_call_operand.vmem [shape: f32[1,256], index: 5, kind: input, shape index: {}]
  %s6 = inlined_call_operand.vmem [shape: f32[1,256], index: 6, kind: input, shape index: {}]
  %s7 = inlined_call_operand.hbm [shape: f32[16,256], index: 7, kind: output, shape index: {0}]
  %s8 = inlined_call_operand.hbm [shape: f32[16,256], index: 8, kind: output, shape index: {1}]
  %s9 = inlined_call_operand.hbm [shape: f32[16,256], index: 9, kind: output, shape index: {2}]
  %10 = xla_tuple %s7, %s8, %s9
  %s11 = sld [smem:[#allocation0]]
  $region77: #{tpu_custom_call.1} parent=0
    _
  %s13 = ssub.s32 1, %s11
  %s14 = scalar_select 0, %s13, %s11
  $region1: #{tpu_custom_call.1} parent=0
    #allocation2 [shape = 'u8[16384]{0}', space=vmem, size = 0x4000, scoped, tag = 'output window, operand 0']
    #allocation3 [shape = 's32[2]{0}', space=sflag, size = 0x8, scoped, tag = 'scoped memory for tpu_custom_call.1']
    #allocation4 [shape = 'u8[16384]{0}', space=vmem, size = 0x4000, scoped, tag = 'output window, operand 1']
    #allocation5 [shape = 's32[2]{0}', space=sflag, size = 0x8, scoped, tag = 'scoped memory for tpu_custom_call.1']
    #allocation6 [shape = 'u8[16384]{0}', space=vmem, size = 0x4000, scoped, tag = 'output window, operand 2']
    %15 = vsyncpa [#allocation3], 0
    %s16 = scalar_lea.sflag [#allocation3], 1
    %17 = vsyncpa %s16, 0
    %18 = vsyncpa [#allocation5], 0
    %s19 = scalar_lea.sflag [#allocation5], 1
    %20 = vsyncpa %s19, 0
    loop: start=0, step=1, limit=4
    $region2: #{tpu_custom_call.1} parent=1 // loop_pre_header
      _
    $region3: #{tpu_custom_call.1} parent=1 // loop_header
      %s22 = sphi 0, %s26
      %p23 = scmp.ge.s32.totalorder %s22, 4
      %s32 = sphi 0, %s34
      %s35 = sphi 0, %s32
      %s36 = sphi 0, %s35
      %s52 = sphi 0, %s36
      %s56 = sphi 0, %s56
      %s58 = sphi 0, %s56
      %s59 = sphi 0, %s58
      %s73 = sphi 0, %s59
      %s77 = sphi 0, %s77
      %s79 = sphi 0, %s77
      %s80 = sphi 0, %s79
      %s94 = sphi 0, %s80
      %s98 = sphi 0, %s98
      %s100 = sphi 0, %s98
      %s101 = sphi 0, %s100
      %s115 = sphi 0, %s101
      %s119 = sphi 0, %s119
      %s121 = sphi 0, %s119
      %s122 = sphi 0, %s121
      %s136 = sphi 0, %s122
      %s140 = sphi 0, %s140
      %s142 = sphi 0, %s140
      %s143 = sphi 0, %s142
      %s157 = sphi 0, %s143
      %s161 = sphi 0, %s161
      %s163 = sphi 0, %s161
      %s164 = sphi 0, %s163
      %s178 = sphi 0, %s164
      %s184 = sphi 0, %s186
      %s187 = sphi 0, %s184
      %s188 = sphi 0, %s187
      %s204 = sphi 0, %s188
      %s210 = sphi 0, %s212
      %s213 = sphi 0, %s210
      %s214 = sphi 0, %s213
      %s230 = sphi 0, %s214
      %s236 = sphi 0, %s238
      %s239 = sphi 0, %s236
      %s240 = sphi 0, %s239
      %s256 = sphi 0, %s240
    $region4: #{tpu_custom_call.1} parent=1 // loop_header_branch
      %25 = sbr.rel (%p23) target = $region8
    $region5: #{tpu_custom_call.1} parent=1 // loop_body
      %s27 = ssub.s32 %s22, 1
      %s28 = ssub.s32 %s22, 2
      %s29 = sadd.s32 %s22, 1
      %s30 = ssub.s32 %s22, %s29
      %p31 = scmp.eq.s32.totalorder %s30, 0
      %s33 = sadd.s32 %s32, 1
      %s34 = scalar_select %p31, %s32, %s33
      %p37 = pneg %p31
      %p38 = scmp.eq.s32.totalorder %s22, 1
      %p39 = por %p37, %p38
      %p40 = scmp.ne.s32.totalorder %s32, %s35
      %p41 = scmp.eq.s32.totalorder %s22, 0
      %p42 = por %p40, %p41
      %p43 = scmp.ne.s32.totalorder %s32, %s35
      %p44 = scmp.eq.s32.totalorder %s27, 1
      %p45 = por %p43, %p44
      %p46 = scmp.ne.s32.totalorder %s35, %s36
      %p47 = scmp.eq.s32.totalorder %s27, 0
      %p48 = por %p46, %p47
      %p49 = scmp.ne.s32.totalorder %s35, %s36
      %p50 = scmp.eq.s32.totalorder %s28, 1
      %p51 = por %p49, %p50
      %p53 = scmp.ne.s32.totalorder %s36, %s52
      %p54 = scmp.eq.s32.totalorder %s28, 0
      %p55 = por %p53, %p54
      %s57 = sadd.s32 %s56, 1
      %p60 = scmp.eq.s32.totalorder %s22, 1
      %p61 = scmp.ne.s32.totalorder %s56, %s58
      %p62 = scmp.eq.s32.totalorder %s22, 0
      %p63 = por %p61, %p62
      %p64 = scmp.ne.s32.totalorder %s56, %s58
      %p65 = scmp.eq.s32.totalorder %s27, 1
      %p66 = por %p64, %p65
      %p67 = scmp.ne.s32.totalorder %s58, %s59
      %p68 = scmp.eq.s32.totalorder %s27, 0
      %p69 = por %p67, %p68
      %p70 = scmp.ne.s32.totalorder %s58, %s59
      %p71 = scmp.eq.s32.totalorder %s28, 1
      %p72 = por %p70, %p71
      %p74 = scmp.ne.s32.totalorder %s59, %s73
      %p75 = scmp.eq.s32.totalorder %s28, 0
      %p76 = por %p74, %p75
      %s78 = sadd.s32 %s77, 1
      %p81 = scmp.eq.s32.totalorder %s22, 1
      %p82 = scmp.ne.s32.totalorder %s77, %s79
      %p83 = scmp.eq.s32.totalorder %s22, 0
      %p84 = por %p82, %p83
      %p85 = scmp.ne.s32.totalorder %s77, %s79
      %p86 = scmp.eq.s32.totalorder %s27, 1
      %p87 = por %p85, %p86
      %p88 = scmp.ne.s32.totalorder %s79, %s80
      %p89 = scmp.eq.s32.totalorder %s27, 0
      %p90 = por %p88, %p89
      %p91 = scmp.ne.s32.totalorder %s79, %s80
      %p92 = scmp.eq.s32.totalorder %s28, 1
      %p93 = por %p91, %p92
      %p95 = scmp.ne.s32.totalorder %s80, %s94
      %p96 = scmp.eq.s32.totalorder %s28, 0
      %p97 = por %p95, %p96
      %s99 = sadd.s32 %s98, 1
      %p102 = scmp.eq.s32.totalorder %s22, 1
      %p103 = scmp.ne.s32.totalorder %s98, %s100
      %p104 = scmp.eq.s32.totalorder %s22, 0
      %p105 = por %p103, %p104
      %p106 = scmp.ne.s32.totalorder %s98, %s100
      %p107 = scmp.eq.s32.totalorder %s27, 1
      %p108 = por %p106, %p107
      %p109 = scmp.ne.s32.totalorder %s100, %s101
      %p110 = scmp.eq.s32.totalorder %s27, 0
      %p111 = por %p109, %p110
      %p112 = scmp.ne.s32.totalorder %s100, %s101
      %p113 = scmp.eq.s32.totalorder %s28, 1
      %p114 = por %p112, %p113
      %p116 = scmp.ne.s32.totalorder %s101, %s115
      %p117 = scmp.eq.s32.totalorder %s28, 0
      %p118 = por %p116, %p117
      %s120 = sadd.s32 %s119, 1
      %p123 = scmp.eq.s32.totalorder %s22, 1
      %p124 = scmp.ne.s32.totalorder %s119, %s121
      %p125 = scmp.eq.s32.totalorder %s22, 0
      %p126 = por %p124, %p125
      %p127 = scmp.ne.s32.totalorder %s119, %s121
      %p128 = scmp.eq.s32.totalorder %s27, 1
      %p129 = por %p127, %p128
      %p130 = scmp.ne.s32.totalorder %s121, %s122
      %p131 = scmp.eq.s32.totalorder %s27, 0
      %p132 = por %p130, %p131
      %p133 = scmp.ne.s32.totalorder %s121, %s122
      %p134 = scmp.eq.s32.totalorder %s28, 1
      %p135 = por %p133, %p134
      %p137 = scmp.ne.s32.totalorder %s122, %s136
      %p138 = scmp.eq.s32.totalorder %s28, 0
      %p139 = por %p137, %p138
      %s141 = sadd.s32 %s140, 1
      %p144 = scmp.eq.s32.totalorder %s22, 1
      %p145 = scmp.ne.s32.totalorder %s140, %s142
      %p146 = scmp.eq.s32.totalorder %s22, 0
      %p147 = por %p145, %p146
      %p148 = scmp.ne.s32.totalorder %s140, %s142
      %p149 = scmp.eq.s32.totalorder %s27, 1
      %p150 = por %p148, %p149
      %p151 = scmp.ne.s32.totalorder %s142, %s143
      %p152 = scmp.eq.s32.totalorder %s27, 0
      %p153 = por %p151, %p152
      %p154 = scmp.ne.s32.totalorder %s142, %s143
      %p155 = scmp.eq.s32.totalorder %s28, 1
      %p156 = por %p154, %p155
      %p158 = scmp.ne.s32.totalorder %s143, %s157
      %p159 = scmp.eq.s32.totalorder %s28, 0
      %p160 = por %p158, %p159
      %s162 = sadd.s32 %s161, 1
      %p165 = scmp.eq.s32.totalorder %s22, 1
      %p166 = scmp.ne.s32.totalorder %s161, %s163
      %p167 = scmp.eq.s32.totalorder %s22, 0
      %p168 = por %p166, %p167
      %p169 = scmp.ne.s32.totalorder %s161, %s163
      %p170 = scmp.eq.s32.totalorder %s27, 1
      %p171 = por %p169, %p170
      %p172 = scmp.ne.s32.totalorder %s163, %s164
      %p173 = scmp.eq.s32.totalorder %s27, 0
      %p174 = por %p172, %p173
      %p175 = scmp.ne.s32.totalorder %s163, %s164
      %p176 = scmp.eq.s32.totalorder %s28, 1
      %p177 = por %p175, %p176
      %p179 = scmp.ne.s32.totalorder %s164, %s178
      %p180 = scmp.eq.s32.totalorder %s28, 0
      %p181 = por %p179, %p180
      %s182 = ssub.s32 %s22, %s29
      %p183 = scmp.eq.s32.totalorder %s182, 0
      %s185 = sadd.s32 %s184, 1
      %s186 = scalar_select %p183, %s184, %s185
      %p189 = pneg %p183
      %p190 = scmp.eq.s32.totalorder %s22, 1
      %p191 = por %p189, %p190
      %p192 = scmp.ne.s32.totalorder %s184, %s187
      %p193 = scmp.eq.s32.totalorder %s22, 0
      %p194 = por %p192, %p193
      %p195 = scmp.ne.s32.totalorder %s184, %s187
      %p196 = scmp.eq.s32.totalorder %s27, 1
      %p197 = por %p195, %p196
      %p198 = scmp.ne.s32.totalorder %s187, %s188
      %p199 = scmp.eq.s32.totalorder %s27, 0
      %p200 = por %p198, %p199
      %p201 = scmp.ne.s32.totalorder %s187, %s188
      %p202 = scmp.eq.s32.totalorder %s28, 1
      %p203 = por %p201, %p202
      %p205 = scmp.ne.s32.totalorder %s188, %s204
      %p206 = scmp.eq.s32.totalorder %s28, 0
      %p207 = por %p205, %p206
      %s208 = ssub.s32 %s22, %s29
      %p209 = scmp.eq.s32.totalorder %s208, 0
      %s211 = sadd.s32 %s210, 1
      %s212 = scalar_select %p209, %s210, %s211
      %p215 = pneg %p209
      %p216 = scmp.eq.s32.totalorder %s22, 1
      %p217 = por %p215, %p216
      %p218 = scmp.ne.s32.totalorder %s210, %s213
      %p219 = scmp.eq.s32.totalorder %s22, 0
      %p220 = por %p218, %p219
      %p221 = scmp.ne.s32.totalorder %s210, %s213
      %p222 = scmp.eq.s32.totalorder %s27, 1
      %p223 = por %p221, %p222
      %p224 = scmp.ne.s32.totalorder %s213, %s214
      %p225 = scmp.eq.s32.totalorder %s27, 0
      %p226 = por %p224, %p225
      %p227 = scmp.ne.s32.totalorder %s213, %s214
      %p228 = scmp.eq.s32.totalorder %s28, 1
      %p229 = por %p227, %p228
      %p231 = scmp.ne.s32.totalorder %s214, %s230
      %p232 = scmp.eq.s32.totalorder %s28, 0
      %p233 = por %p231, %p232
      %s234 = ssub.s32 %s22, %s29
      %p235 = scmp.eq.s32.totalorder %s234, 0
      %s237 = sadd.s32 %s236, 1
      %s238 = scalar_select %p235, %s236, %s237
      %p241 = pneg %p235
      %p242 = scmp.eq.s32.totalorder %s22, 1
      %p243 = por %p241, %p242
      %p244 = scmp.ne.s32.totalorder %s236, %s239
      %p245 = scmp.eq.s32.totalorder %s22, 0
      %p246 = por %p244, %p245
      %p247 = scmp.ne.s32.totalorder %s236, %s239
      %p248 = scmp.eq.s32.totalorder %s27, 1
      %p249 = por %p247, %p248
      %p250 = scmp.ne.s32.totalorder %s239, %s240
      %p251 = scmp.eq.s32.totalorder %s27, 0
      %p252 = por %p250, %p251
      %p253 = scmp.ne.s32.totalorder %s239, %s240
      %p254 = scmp.eq.s32.totalorder %s28, 1
      %p255 = por %p253, %p254
      %p257 = scmp.ne.s32.totalorder %s240, %s256
      %p258 = scmp.eq.s32.totalorder %s28, 0
      %p259 = por %p257, %p258
      %p260 = scmp.le.s32.totalorder 1, %s22
      %p261 = scmp.lt.s32.totalorder %s22, 3
      %p262 = pnand %p260, %p261
      %p263 = pneg %p262
      // Predicated region
      $region9: #{tpu_custom_call.1} parent=5 // pred_check
        _
      $region10: #{tpu_custom_call.1} parent=5 // pred_check_branch
        %265 = sbr.rel (%p262) target = $region12
      $region11: #{tpu_custom_call.1} parent=5 // pred_region
        %s266 = ssub.s32 %s22, 1
        // Predicated region
        $region13: #{tpu_custom_call.1} parent=11 // pred_check
          %p267 = pneg %p69
        $region14: #{tpu_custom_call.1} parent=11 // pred_check_branch
          %269 = sbr.rel (%p267) target = $region16
        $region15: #{tpu_custom_call.1} parent=11 // pred_region
          _
        $region16: #{tpu_custom_call.1} parent=11 // pred_fallthru
          _
        // Predicated region
        $region17: #{tpu_custom_call.1} parent=11 // pred_check
          %p270 = pneg %p90
        $region18: #{tpu_custom_call.1} parent=11 // pred_check_branch
          %272 = sbr.rel (%p270) target = $region20
        $region19: #{tpu_custom_call.1} parent=11 // pred_region
          _
        $region20: #{tpu_custom_call.1} parent=11 // pred_fallthru
          _
        // Predicated region
        $region21: #{tpu_custom_call.1} parent=11 // pred_check
          %p273 = pneg %p111
        $region22: #{tpu_custom_call.1} parent=11 // pred_check_branch
          %275 = sbr.rel (%p273) target = $region24
        $region23: #{tpu_custom_call.1} parent=11 // pred_region
          _
        $region24: #{tpu_custom_call.1} parent=11 // pred_fallthru
          _
        // Predicated region
        $region25: #{tpu_custom_call.1} parent=11 // pred_check
          %p276 = pneg %p132
        $region26: #{tpu_custom_call.1} parent=11 // pred_check_branch
          %278 = sbr.rel (%p276) target = $region28
        $region27: #{tpu_custom_call.1} parent=11 // pred_region
          _
        $region28: #{tpu_custom_call.1} parent=11 // pred_fallthru
          _
        // Predicated region
        $region29: #{tpu_custom_call.1} parent=11 // pred_check
          %p279 = pneg %p153
        $region30: #{tpu_custom_call.1} parent=11 // pred_check_branch
          %281 = sbr.rel (%p279) target = $region32
        $region31: #{tpu_custom_call.1} parent=11 // pred_region
          _
        $region32: #{tpu_custom_call.1} parent=11 // pred_fallthru
          _
        // Predicated region
        $region33: #{tpu_custom_call.1} parent=11 // pred_check
          %p282 = pneg %p174
        $region34: #{tpu_custom_call.1} parent=11 // pred_check_branch
          %284 = sbr.rel (%p282) target = $region36
        $region35: #{tpu_custom_call.1} parent=11 // pred_region
          _
        $region36: #{tpu_custom_call.1} parent=11 // pred_fallthru
          _
      $region12: #{tpu_custom_call.1} parent=5 // pred_fallthru
        _
      %p285 = scmp.lt.s32.totalorder %s22, 2
      // Predicated region
      $region37: #{tpu_custom_call.1} parent=5 // pred_check
        %p286 = pneg %p285
      $region38: #{tpu_custom_call.1} parent=5 // pred_check_branch
        %288 = sbr.rel (%p286) target = $region40
      $region39: #{tpu_custom_call.1} parent=5 // pred_region
        // Predicated region
        $region41: #{tpu_custom_call.1} parent=39 // pred_check
          %p289 = pneg %p42
        $region42: #{tpu_custom_call.1} parent=39 // pred_check_branch
          %291 = sbr.rel (%p289) target = $region44
        $region43: #{tpu_custom_call.1} parent=39 // pred_region
          %p292 = scmp.lt.s32.totalorder %s22, 1
          %s293 = scalar_select %p292, %s22, 1
          %s294 = smul.addr %s293, 8
          %s295 = scalar_lea.vmem %s0, %s294
        $region44: #{tpu_custom_call.1} parent=39 // pred_fallthru
          _
      $region40: #{tpu_custom_call.1} parent=5 // pred_fallthru
        _
      %p296 = scmp.le.s32.totalorder 1, %s22
      %p297 = scmp.lt.s32.totalorder %s22, 3
      %p298 = pnand %p296, %p297
      %p299 = pneg %p298
      // Predicated region
      $region45: #{tpu_custom_call.1} parent=5 // pred_check
        _
      $region46: #{tpu_custom_call.1} parent=5 // pred_check_branch
        %301 = sbr.rel (%p298) target = $region48
      $region47: #{tpu_custom_call.1} parent=5 // pred_region
        %s302 = ssub.s32 %s22, 1
        %p303 = scmp.lt.s32.totalorder %s27, 1
        %s304 = scalar_select %p303, %s27, 1
        %s305 = smul.addr %s304, 8
        %s306 = scalar_lea.vmem %s0, %s305
        %p307 = pneg %p48
        %p308 = pneg %p45
        %p309 = pneg %p69
        %p310 = pneg %p66
        %p311 = pneg %p90
        %p312 = pneg %p87
        %p313 = pneg %p111
        %p314 = pneg %p108
        %p315 = pneg %p132
        %p316 = pneg %p129
        %p317 = pneg %p153
        %p318 = pneg %p150
        %p319 = pneg %p174
        %p320 = pneg %p171
        %p321 = pneg %p200
        %p322 = pneg %p197
        %s323 = sand.u32 %s187, 1
        %s324 = scalar_lea.sflag [#allocation3], %s323
        %s325 = sand.u32 %s187, 1
        %s326 = smul.addr %s325, 16
        %s327 = scalar_lea.vmem [#allocation2], %s326
        %p328 = pneg %p226
        %p329 = pneg %p223
        %s330 = sand.u32 %s27, 1
        %s331 = scalar_lea.sflag [#allocation5], %s330
        %s332 = sand.u32 %s213, 1
        %s333 = smul.addr %s332, 16
        %s334 = scalar_lea.vmem [#allocation4], %s333
        %p335 = pneg %p252
        %p336 = pneg %p249
        %s337 = sand.u32 %s27, 1
        %s338 = scalar_lea.sflag [#allocation5], %s337
        %s339 = sand.u32 %s239, 1
        %s340 = smul.addr %s339, 16
        %s341 = scalar_lea.vmem [#allocation6], %s340
        %p342 = scmp.lt.s32.totalorder %s27, 1
        %s343 = scalar_select %p342, %s27, 1
        %s344 = smul.addr %s343, 8
        %s345 = scalar_lea.vmem %s0, %s344
        %v346 = vld [vmem:[%s345] sm:$0xff]
        %v347 = vld [vmem:[%s1] sm:$0xff]
        %v348 = vld [vmem:[%s1 + $0x8] sm:$0xff]
        %v349 = vld [vmem:[%s1 + $0x10] sm:$0xff]
        %v350 = vld [vmem:[%s1 + $0x18] sm:$0xff]
        %v351 = vld [vmem:[%s1 + $0x20] sm:$0xff]
        %v352 = vld [vmem:[%s1 + $0x28] sm:$0xff]
        %v353 = vld [vmem:[%s1 + $0x30] sm:$0xff]
        %v354 = vld [vmem:[%s1 + $0x38] sm:$0xff]
        %v355 = vld [vmem:[%s1 + $0x40] sm:$0xff]
        %v356 = vld [vmem:[%s1 + $0x48] sm:$0xff]
        %v357 = vld [vmem:[%s1 + $0x50] sm:$0xff]
        %v358 = vld [vmem:[%s1 + $0x58] sm:$0xff]
        %v359 = vld [vmem:[%s1 + $0x60] sm:$0xff]
        %v360 = vld [vmem:[%s1 + $0x68] sm:$0xff]
        %v361 = vld [vmem:[%s1 + $0x70] sm:$0xff]
        %v362 = vld [vmem:[%s1 + $0x78] sm:$0xff]
        %v363 = vld [vmem:[%s1 + $0x80] sm:$0xff]
        %v364 = vld [vmem:[%s1 + $0x88] sm:$0xff]
        %v365 = vld [vmem:[%s1 + $0x90] sm:$0xff]
        %v366 = vld [vmem:[%s1 + $0x98] sm:$0xff]
        %v367 = vld [vmem:[%s1 + $0xa0] sm:$0xff]
        %v368 = vld [vmem:[%s1 + $0xa8] sm:$0xff]
        %v369 = vld [vmem:[%s1 + $0xb0] sm:$0xff]
        %v370 = vld [vmem:[%s1 + $0xb8] sm:$0xff]
        %v371 = vld [vmem:[%s1 + $0xc0] sm:$0xff]
        %v372 = vld [vmem:[%s1 + $0xc8] sm:$0xff]
        %v373 = vld [vmem:[%s1 + $0xd0] sm:$0xff]
        %v374 = vld [vmem:[%s1 + $0xd8] sm:$0xff]
        %v375 = vld [vmem:[%s1 + $0xe0] sm:$0xff]
        %v376 = vld [vmem:[%s1 + $0xe8] sm:$0xff]
        %v377 = vld [vmem:[%s1 + $0xf0] sm:$0xff]
        %v378 = vld [vmem:[%s1 + $0xf8] sm:$0xff]
        %v379 = vld [vmem:[%s4] sm:$0x3]
        %v381 = vperm.slane %v379, 0
        %v382 = vperm.slane %v379, 1
        %vm385 = vcmask 261120
        %v387 = vsel %vm385, %v346, 0
        %v390 = vsel %vm385, %v347, 0
        %v393 = vsel %vm385, %v348, 0
        %v396 = vsel %vm385, %v349, 0
        %v399 = vsel %vm385, %v350, 0
        %v402 = vsel %vm385, %v351, 0
        %v405 = vsel %vm385, %v352, 0
        %v408 = vsel %vm385, %v353, 0
        %v411 = vsel %vm385, %v354, 0
        %v414 = vsel %vm385, %v355, 0
        %v417 = vsel %vm385, %v356, 0
        %v420 = vsel %vm385, %v357, 0
        %v423 = vsel %vm385, %v358, 0
        %v426 = vsel %vm385, %v359, 0
        %v429 = vsel %vm385, %v360, 0
        %v432 = vsel %vm385, %v361, 0
        %v435 = vsel %vm385, %v362, 0
        %v438 = vsel %vm385, %v363, 0
        %v441 = vsel %vm385, %v364, 0
        %v444 = vsel %vm385, %v365, 0
        %v447 = vsel %vm385, %v366, 0
        %v450 = vsel %vm385, %v367, 0
        %v453 = vsel %vm385, %v368, 0
        %v456 = vsel %vm385, %v369, 0
        %v459 = vsel %vm385, %v370, 0
        %v462 = vsel %vm385, %v371, 0
        %v465 = vsel %vm385, %v372, 0
        %v468 = vsel %vm385, %v373, 0
        %v471 = vsel %vm385, %v374, 0
        %v474 = vsel %vm385, %v375, 0
        %v477 = vsel %vm385, %v376, 0
        %v480 = vsel %vm385, %v377, 0
        %v483 = vsel %vm385, %v378, 0
        %485 = vmatpush.xpose.msra.mxu0 %v435
        %486 = vmatpush.xpose.msra.mxu0 %v432
        %487 = vmatpush.xpose.msra.mxu0 %v429
        %488 = vmatpush.xpose.msra.mxu0 %v426
        %489 = vmatpush.xpose.msra.mxu0 %v423
        %490 = vmatpush.xpose.msra.mxu0 %v420
        %491 = vmatpush.xpose.msra.mxu0 %v417
        %492 = vmatpush.xpose.msra.mxu0 %v414
        %493 = vmatpush.xpose.msra.mxu0 %v411
        %494 = vmatpush.xpose.msra.mxu0 %v408
        %495 = vmatpush.xpose.msra.mxu0 %v405
        %496 = vmatpush.xpose.msra.mxu0 %v402
        %497 = vmatpush.xpose.msra.mxu0 %v399
        %498 = vmatpush.xpose.msra.mxu0 %v396
        %499 = vmatpush.xpose.msra.mxu0 %v393
        %500 = vmatpush.xpose.msra.mxu0 %v390
        %501 = vmatmul.f32.gmra.mxu0 %v387
        %v502 = vpop.f32.mrf.mxu0
        %v503 = vadd.f32 %v381, %v502
        %504 = vdwg.mxu0
        %505 = vmatpush.xpose.msra.mxu0 %v483
        %506 = vmatpush.xpose.msra.mxu0 %v480
        %507 = vmatpush.xpose.msra.mxu0 %v477
        %508 = vmatpush.xpose.msra.mxu0 %v474
        %509 = vmatpush.xpose.msra.mxu0 %v471
        %510 = vmatpush.xpose.msra.mxu0 %v468
        %511 = vmatpush.xpose.msra.mxu0 %v465
        %512 = vmatpush.xpose.msra.mxu0 %v462
        %513 = vmatpush.xpose.msra.mxu0 %v459
        %514 = vmatpush.xpose.msra.mxu0 %v456
        %515 = vmatpush.xpose.msra.mxu0 %v453
        %516 = vmatpush.xpose.msra.mxu0 %v450
        %517 = vmatpush.xpose.msra.mxu0 %v447
        %518 = vmatpush.xpose.msra.mxu0 %v444
        %519 = vmatpush.xpose.msra.mxu0 %v441
        %520 = vmatpush.xpose.msra.mxu0 %v438
        %521 = vmatmul.f32.gmra.mxu0 %v387
        %v522 = vpop.f32.mrf.mxu0
        %v523 = vadd.f32 %v382, %v522
        %524 = vdwg.mxu0
        %525 = vst [vmem:[%s327] sm:$0xff] %v503
        %526 = vst [vmem:[%s327 + $0x8] sm:$0xff] %v523
        %v527 = vld [vmem:[%s2] sm:$0xff]
        %v528 = vld [vmem:[%s2 + $0x8] sm:$0xff]
        %v529 = vld [vmem:[%s2 + $0x10] sm:$0xff]
        %v530 = vld [vmem:[%s2 + $0x18] sm:$0xff]
        %v531 = vld [vmem:[%s2 + $0x20] sm:$0xff]
        %v532 = vld [vmem:[%s2 + $0x28] sm:$0xff]
        %v533 = vld [vmem:[%s2 + $0x30] sm:$0xff]
        %v534 = vld [vmem:[%s2 + $0x38] sm:$0xff]
        %v535 = vld [vmem:[%s2 + $0x40] sm:$0xff]
        %v536 = vld [vmem:[%s2 + $0x48] sm:$0xff]
        %v537 = vld [vmem:[%s2 + $0x50] sm:$0xff]
        %v538 = vld [vmem:[%s2 + $0x58] sm:$0xff]
        %v539 = vld [vmem:[%s2 + $0x60] sm:$0xff]
        %v540 = vld [vmem:[%s2 + $0x68] sm:$0xff]
        %v541 = vld [vmem:[%s2 + $0x70] sm:$0xff]
        %v542 = vld [vmem:[%s2 + $0x78] sm:$0xff]
        %v543 = vld [vmem:[%s2 + $0x80] sm:$0xff]
        %v544 = vld [vmem:[%s2 + $0x88] sm:$0xff]
        %v545 = vld [vmem:[%s2 + $0x90] sm:$0xff]
        %v546 = vld [vmem:[%s2 + $0x98] sm:$0xff]
        %v547 = vld [vmem:[%s2 + $0xa0] sm:$0xff]
        %v548 = vld [vmem:[%s2 + $0xa8] sm:$0xff]
        %v549 = vld [vmem:[%s2 + $0xb0] sm:$0xff]
        %v550 = vld [vmem:[%s2 + $0xb8] sm:$0xff]
        %v551 = vld [vmem:[%s2 + $0xc0] sm:$0xff]
        %v552 = vld [vmem:[%s2 + $0xc8] sm:$0xff]
        %v553 = vld [vmem:[%s2 + $0xd0] sm:$0xff]
        %v554 = vld [vmem:[%s2 + $0xd8] sm:$0xff]
        %v555 = vld [vmem:[%s2 + $0xe0] sm:$0xff]
        %v556 = vld [vmem:[%s2 + $0xe8] sm:$0xff]
        %v557 = vld [vmem:[%s2 + $0xf0] sm:$0xff]
        %v558 = vld [vmem:[%s2 + $0xf8] sm:$0xff]
        %v559 = vld [vmem:[%s5] sm:$0x3]
        %v561 = vperm.slane %v559, 0
        %v562 = vperm.slane %v559, 1
        %v566 = vsel %vm385, %v527, 0
        %v569 = vsel %vm385, %v528, 0
        %v572 = vsel %vm385, %v529, 0
        %v575 = vsel %vm385, %v530, 0
        %v578 = vsel %vm385, %v531, 0
        %v581 = vsel %vm385, %v532, 0
        %v584 = vsel %vm385, %v533, 0
        %v587 = vsel %vm385, %v534, 0
        %v590 = vsel %vm385, %v535, 0
        %v593 = vsel %vm385, %v536, 0
        %v596 = vsel %vm385, %v537, 0
        %v599 = vsel %vm385, %v538, 0
        %v602 = vsel %vm385, %v539, 0
        %v605 = vsel %vm385, %v540, 0
        %v608 = vsel %vm385, %v541, 0
        %v611 = vsel %vm385, %v542, 0
        %v614 = vsel %vm385, %v543, 0
        %v617 = vsel %vm385, %v544, 0
        %v620 = vsel %vm385, %v545, 0
        %v623 = vsel %vm385, %v546, 0
        %v626 = vsel %vm385, %v547, 0
        %v629 = vsel %vm385, %v548, 0
        %v632 = vsel %vm385, %v549, 0
        %v635 = vsel %vm385, %v550, 0
        %v638 = vsel %vm385, %v551, 0
        %v641 = vsel %vm385, %v552, 0
        %v644 = vsel %vm385, %v553, 0
        %v647 = vsel %vm385, %v554, 0
        %v650 = vsel %vm385, %v555, 0
        %v653 = vsel %vm385, %v556, 0
        %v656 = vsel %vm385, %v557, 0
        %v659 = vsel %vm385, %v558, 0
        %661 = vmatpush.xpose.msra.mxu0 %v611
        %662 = vmatpush.xpose.msra.mxu0 %v608
        %663 = vmatpush.xpose.msra.mxu0 %v605
        %664 = vmatpush.xpose.msra.mxu0 %v602
        %665 = vmatpush.xpose.msra.mxu0 %v599
        %666 = vmatpush.xpose.msra.mxu0 %v596
        %667 = vmatpush.xpose.msra.mxu0 %v593
        %668 = vmatpush.xpose.msra.mxu0 %v590
        %669 = vmatpush.xpose.msra.mxu0 %v587
        %670 = vmatpush.xpose.msra.mxu0 %v584
        %671 = vmatpush.xpose.msra.mxu0 %v581
        %672 = vmatpush.xpose.msra.mxu0 %v578
        %673 = vmatpush.xpose.msra.mxu0 %v575
        %674 = vmatpush.xpose.msra.mxu0 %v572
        %675 = vmatpush.xpose.msra.mxu0 %v569
        %676 = vmatpush.xpose.msra.mxu0 %v566
        %677 = vmatmul.f32.gmra.mxu0 %v387
        %v678 = vpop.f32.mrf.mxu0
        %v679 = vadd.f32 %v561, %v678
        %680 = vdwg.mxu0
        %681 = vmatpush.xpose.msra.mxu0 %v659
        %682 = vmatpush.xpose.msra.mxu0 %v656
        %683 = vmatpush.xpose.msra.mxu0 %v653
        %684 = vmatpush.xpose.msra.mxu0 %v650
        %685 = vmatpush.xpose.msra.mxu0 %v647
        %686 = vmatpush.xpose.msra.mxu0 %v644
        %687 = vmatpush.xpose.msra.mxu0 %v641
        %688 = vmatpush.xpose.msra.mxu0 %v638
        %689 = vmatpush.xpose.msra.mxu0 %v635
        %690 = vmatpush.xpose.msra.mxu0 %v632
        %691 = vmatpush.xpose.msra.mxu0 %v629
        %692 = vmatpush.xpose.msra.mxu0 %v626
        %693 = vmatpush.xpose.msra.mxu0 %v623
        %694 = vmatpush.xpose.msra.mxu0 %v620
        %695 = vmatpush.xpose.msra.mxu0 %v617
        %696 = vmatpush.xpose.msra.mxu0 %v614
        %697 = vmatmul.f32.gmra.mxu0 %v387
        %v698 = vpop.f32.mrf.mxu0
        %v699 = vadd.f32 %v562, %v698
        %700 = vdwg.mxu0
        %701 = vst [vmem:[%s334] sm:$0xff] %v679
        %702 = vst [vmem:[%s334 + $0x8] sm:$0xff] %v699
        %v703 = vld [vmem:[%s3] sm:$0xff]
        %v704 = vld [vmem:[%s3 + $0x8] sm:$0xff]
        %v705 = vld [vmem:[%s3 + $0x10] sm:$0xff]
        %v706 = vld [vmem:[%s3 + $0x18] sm:$0xff]
        %v707 = vld [vmem:[%s3 + $0x20] sm:$0xff]
        %v708 = vld [vmem:[%s3 + $0x28] sm:$0xff]
        %v709 = vld [vmem:[%s3 + $0x30] sm:$0xff]
        %v710 = vld [vmem:[%s3 + $0x38] sm:$0xff]
        %v711 = vld [vmem:[%s3 + $0x40] sm:$0xff]
        %v712 = vld [vmem:[%s3 + $0x48] sm:$0xff]
        %v713 = vld [vmem:[%s3 + $0x50] sm:$0xff]
        %v714 = vld [vmem:[%s3 + $0x58] sm:$0xff]
        %v715 = vld [vmem:[%s3 + $0x60] sm:$0xff]
        %v716 = vld [vmem:[%s3 + $0x68] sm:$0xff]
        %v717 = vld [vmem:[%s3 + $0x70] sm:$0xff]
        %v718 = vld [vmem:[%s3 + $0x78] sm:$0xff]
        %v719 = vld [vmem:[%s3 + $0x80] sm:$0xff]
        %v720 = vld [vmem:[%s3 + $0x88] sm:$0xff]
        %v721 = vld [vmem:[%s3 + $0x90] sm:$0xff]
        %v722 = vld [vmem:[%s3 + $0x98] sm:$0xff]
        %v723 = vld [vmem:[%s3 + $0xa0] sm:$0xff]
        %v724 = vld [vmem:[%s3 + $0xa8] sm:$0xff]
        %v725 = vld [vmem:[%s3 + $0xb0] sm:$0xff]
        %v726 = vld [vmem:[%s3 + $0xb8] sm:$0xff]
        %v727 = vld [vmem:[%s3 + $0xc0] sm:$0xff]
        %v728 = vld [vmem:[%s3 + $0xc8] sm:$0xff]
        %v729 = vld [vmem:[%s3 + $0xd0] sm:$0xff]
        %v730 = vld [vmem:[%s3 + $0xd8] sm:$0xff]
        %v731 = vld [vmem:[%s3 + $0xe0] sm:$0xff]
        %v732 = vld [vmem:[%s3 + $0xe8] sm:$0xff]
        %v733 = vld [vmem:[%s3 + $0xf0] sm:$0xff]
        %v734 = vld [vmem:[%s3 + $0xf8] sm:$0xff]
        %v735 = vld [vmem:[%s6] sm:$0x3]
        %v737 = vperm.slane %v735, 0
        %v738 = vperm.slane %v735, 1
        %v742 = vsel %vm385, %v703, 0
        %v745 = vsel %vm385, %v704, 0
        %v748 = vsel %vm385, %v705, 0
        %v751 = vsel %vm385, %v706, 0
        %v754 = vsel %vm385, %v707, 0
        %v757 = vsel %vm385, %v708, 0
        %v760 = vsel %vm385, %v709, 0
        %v763 = vsel %vm385, %v710, 0
        %v766 = vsel %vm385, %v711, 0
        %v769 = vsel %vm385, %v712, 0
        %v772 = vsel %vm385, %v713, 0
        %v775 = vsel %vm385, %v714, 0
        %v778 = vsel %vm385, %v715, 0
        %v781 = vsel %vm385, %v716, 0
        %v784 = vsel %vm385, %v717, 0
        %v787 = vsel %vm385, %v718, 0
        %v790 = vsel %vm385, %v719, 0
        %v793 = vsel %vm385, %v720, 0
        %v796 = vsel %vm385, %v721, 0
        %v799 = vsel %vm385, %v722, 0
        %v802 = vsel %vm385, %v723, 0
        %v805 = vsel %vm385, %v724, 0
        %v808 = vsel %vm385, %v725, 0
        %v811 = vsel %vm385, %v726, 0
        %v814 = vsel %vm385, %v727, 0
        %v817 = vsel %vm385, %v728, 0
        %v820 = vsel %vm385, %v729, 0
        %v823 = vsel %vm385, %v730, 0
        %v826 = vsel %vm385, %v731, 0
        %v829 = vsel %vm385, %v732, 0
        %v832 = vsel %vm385, %v733, 0
        %v835 = vsel %vm385, %v734, 0
        %837 = vmatpush.xpose.msra.mxu0 %v787
        %838 = vmatpush.xpose.msra.mxu0 %v784
        %839 = vmatpush.xpose.msra.mxu0 %v781
        %840 = vmatpush.xpose.msra.mxu0 %v778
        %841 = vmatpush.xpose.msra.mxu0 %v775
        %842 = vmatpush.xpose.msra.mxu0 %v772
        %843 = vmatpush.xpose.msra.mxu0 %v769
        %844 = vmatpush.xpose.msra.mxu0 %v766
        %845 = vmatpush.xpose.msra.mxu0 %v763
        %846 = vmatpush.xpose.msra.mxu0 %v760
        %847 = vmatpush.xpose.msra.mxu0 %v757
        %848 = vmatpush.xpose.msra.mxu0 %v754
        %849 = vmatpush.xpose.msra.mxu0 %v751
        %850 = vmatpush.xpose.msra.mxu0 %v748
        %851 = vmatpush.xpose.msra.mxu0 %v745
        %852 = vmatpush.xpose.msra.mxu0 %v742
        %853 = vmatmul.f32.gmra.mxu0 %v387
        %v854 = vpop.f32.mrf.mxu0
        %v855 = vadd.f32 %v737, %v854
        %856 = vdwg.mxu0
        %857 = vmatpush.xpose.msra.mxu0 %v835
        %858 = vmatpush.xpose.msra.mxu0 %v832
        %859 = vmatpush.xpose.msra.mxu0 %v829
        %860 = vmatpush.xpose.msra.mxu0 %v826
        %861 = vmatpush.xpose.msra.mxu0 %v823
        %862 = vmatpush.xpose.msra.mxu0 %v820
        %863 = vmatpush.xpose.msra.mxu0 %v817
        %864 = vmatpush.xpose.msra.mxu0 %v814
        %865 = vmatpush.xpose.msra.mxu0 %v811
        %866 = vmatpush.xpose.msra.mxu0 %v808
        %867 = vmatpush.xpose.msra.mxu0 %v805
        %868 = vmatpush.xpose.msra.mxu0 %v802
        %869 = vmatpush.xpose.msra.mxu0 %v799
        %870 = vmatpush.xpose.msra.mxu0 %v796
        %871 = vmatpush.xpose.msra.mxu0 %v793
        %872 = vmatpush.xpose.msra.mxu0 %v790
        %873 = vmatmul.f32.gmra.mxu0 %v387
        %v874 = vpop.f32.mrf.mxu0
        %v875 = vadd.f32 %v738, %v874
        %876 = vdwg.mxu0
        %877 = vst [vmem:[%s341] sm:$0xff] %v855
        %878 = vst [vmem:[%s341 + $0x8] sm:$0xff] %v875
        %s879 = sand.u32 %s187, 1
        %s880 = scalar_lea.sflag [#allocation3], %s879
        %s881 = sand.u32 %s187, 1
        %s882 = smul.addr %s881, 16
        %s883 = scalar_lea.vmem [#allocation2], %s882
        %s884 = sand.u32 %s27, 1
        %s885 = scalar_lea.sflag [#allocation5], %s884
        %s886 = sand.u32 %s213, 1
        %s887 = smul.addr %s886, 16
        %s888 = scalar_lea.vmem [#allocation4], %s887
        %s889 = sand.u32 %s27, 1
        %s890 = scalar_lea.sflag [#allocation5], %s889
        %s891 = sand.u32 %s239, 1
        %s892 = smul.addr %s891, 16
        %s893 = scalar_lea.vmem [#allocation6], %s892
        // Predicated region
        $region49: #{tpu_custom_call.1} parent=47 // pred_check
          %p894 = pneg %p197
        $region50: #{tpu_custom_call.1} parent=47 // pred_check_branch
          %896 = sbr.rel (%p894) target = $region52
        $region51: #{tpu_custom_call.1} parent=47 // pred_region
          %898 = vsyncadd %s880, 0
          %s899 = smul.addr %s27, 2
          %s900 = smul.addr %s899, 8
          %s901 = scalar_lea.hbm %s7, %s900
          %s903 = sshll.u32 %s883, 4
          %s904 = int_to_ptr.vmem [resolvable:$true] %s903
          %s905 = sshll.u32 %s901, 4
          %s906 = int_to_ptr.hbm [resolvable:$true] %s905
          %908 = dma.vmem_to_hbm [thread:$0]  %s904, 256, %s906, %s880
        $region52: #{tpu_custom_call.1} parent=47 // pred_fallthru
          _
        // Predicated region
        $region53: #{tpu_custom_call.1} parent=47 // pred_check
          %p909 = pneg %p223
        $region54: #{tpu_custom_call.1} parent=47 // pred_check_branch
          %911 = sbr.rel (%p909) target = $region56
        $region55: #{tpu_custom_call.1} parent=47 // pred_region
          %913 = vsyncadd %s885, 0
          %s914 = smul.addr %s27, 2
          %s915 = smul.addr %s914, 8
          %s916 = scalar_lea.hbm %s8, %s915
          %s918 = sshll.u32 %s888, 4
          %s919 = int_to_ptr.vmem [resolvable:$true] %s918
          %s920 = sshll.u32 %s916, 4
          %s921 = int_to_ptr.hbm [resolvable:$true] %s920
          %923 = dma.vmem_to_hbm [thread:$0]  %s919, 256, %s921, %s885
        $region56: #{tpu_custom_call.1} parent=47 // pred_fallthru
          _
        // Predicated region
        $region57: #{tpu_custom_call.1} parent=47 // pred_check
          %p924 = pneg %p249
        $region58: #{tpu_custom_call.1} parent=47 // pred_check_branch
          %926 = sbr.rel (%p924) target = $region60
        $region59: #{tpu_custom_call.1} parent=47 // pred_region
          %928 = vsyncadd %s890, 0
          %s929 = smul.addr %s27, 2
          %s930 = smul.addr %s929, 8
          %s931 = scalar_lea.hbm %s9, %s930
          %s933 = sshll.u32 %s893, 4
          %s934 = int_to_ptr.vmem [resolvable:$true] %s933
          %s935 = sshll.u32 %s931, 4
          %s936 = int_to_ptr.hbm [resolvable:$true] %s935
          %938 = dma.vmem_to_hbm [thread:$0]  %s934, 256, %s936, %s890
        $region60: #{tpu_custom_call.1} parent=47 // pred_fallthru
          _
      $region48: #{tpu_custom_call.1} parent=5 // pred_fallthru
        _
      %p939 = scmp.le.s32.totalorder 2, %s22
      // Predicated region
      $region61: #{tpu_custom_call.1} parent=5 // pred_check
        %p940 = pneg %p939
      $region62: #{tpu_custom_call.1} parent=5 // pred_check_branch
        %942 = sbr.rel (%p940) target = $region64
      $region63: #{tpu_custom_call.1} parent=5 // pred_region
        %s943 = ssub.s32 %s22, 2
        // Predicated region
        $region65: #{tpu_custom_call.1} parent=63 // pred_check
          %p944 = pneg %p203
        $region66: #{tpu_custom_call.1} parent=63 // pred_check_branch
          %946 = sbr.rel (%p944) target = $region68
        $region67: #{tpu_custom_call.1} parent=63 // pred_region
          %s947 = sand.u32 %s188, 1
          %s948 = scalar_lea.sflag [#allocation3], %s947
          %s949 = sand.u32 %s188, 1
          %s950 = smul.addr %s949, 16
          %s951 = scalar_lea.vmem [#allocation2], %s950
          %953 = dma.done %s948, 256
        $region68: #{tpu_custom_call.1} parent=63 // pred_fallthru
          _
        // Predicated region
        $region69: #{tpu_custom_call.1} parent=63 // pred_check
          %p954 = pneg %p229
        $region70: #{tpu_custom_call.1} parent=63 // pred_check_branch
          %956 = sbr.rel (%p954) target = $region72
        $region71: #{tpu_custom_call.1} parent=63 // pred_region
          %s957 = sand.u32 %s28, 1
          %s958 = scalar_lea.sflag [#allocation5], %s957
          %s959 = sand.u32 %s214, 1
          %s960 = smul.addr %s959, 16
          %s961 = scalar_lea.vmem [#allocation4], %s960
          %963 = dma.done %s958, 256
        $region72: #{tpu_custom_call.1} parent=63 // pred_fallthru
          _
        // Predicated region
        $region73: #{tpu_custom_call.1} parent=63 // pred_check
          %p964 = pneg %p255
        $region74: #{tpu_custom_call.1} parent=63 // pred_check_branch
          %966 = sbr.rel (%p964) target = $region76
        $region75: #{tpu_custom_call.1} parent=63 // pred_region
          %s967 = sand.u32 %s28, 1
          %s968 = scalar_lea.sflag [#allocation5], %s967
          %s969 = sand.u32 %s240, 1
          %s970 = smul.addr %s969, 16
          %s971 = scalar_lea.vmem [#allocation6], %s970
          %973 = dma.done %s968, 256
        $region76: #{tpu_custom_call.1} parent=63 // pred_fallthru
          _
      $region64: #{tpu_custom_call.1} parent=5 // pred_fallthru
        _
    $region6: #{tpu_custom_call.1} parent=1 // loop_footer
      %s26 = sadd.s32 1, %s22
    $region7: #{tpu_custom_call.1} parent=1 // loop_footer_branch
      %21 = sbr.rel target = $region3
    $region8: #{tpu_custom_call.1} parent=1 // loop_exit
      _
    %974 = vsyncpa [#allocation3], 1
    %s975 = scalar_lea.sflag [#allocation3], 1
    %976 = vsyncpa %s975, 1
    %977 = vsyncpa [#allocation5], 1
    %s978 = scalar_lea.sflag [#allocation5], 1
    %979 = vsyncpa %s978, 1

</llo_original>
